<compile_context>
chip_gen: v6e
topology: v6e:2x2x1
jax: 0.10.0
libtpu: 0.0.40
codegen_flags: <defaults>
</compile_context>

<pallas_src>
import functools

import numpy as np

import jax
import jax.numpy as jnp
from jax import lax
from jax.experimental import pallas as pl
from jax.experimental.pallas import tpu as pltpu


def _round_up(x, m):
    return (x + m - 1) // m * m


def _vmem_capacity():
    """Physical VMEM bytes per TensorCore (fallback: 64 MiB, the v7x minimum)."""
    try:
        return int(pltpu.get_tpu_info().vmem_capacity_bytes)
    except Exception:
        return 64 << 20


def _choose_tk(bc, hw, itemsize):
    """Lane width (K tile) of the streamed feature block.

    - Whole HW axis in one block when it is small (a full-dim block is exempt
      from the 128-lane divisibility rule).
    - Otherwise a multiple of 128 sized from a generation-aware VMEM budget
      for the two double-buffered feature tiles (~45 MiB on v5e/v6e, ~22 MiB
      on v7x), aiming for >= 4 K steps so the DMA pipeline and both v7x
      TensorCores get work, with the per-tile cap lifted to 8192 lanes.
    """
    if hw <= 512:
        return hw
    budget = int(_vmem_capacity() * 0.35)
    max_tk = (budget // (2 * bc * itemsize)) // 128 * 128
    max_tk = max(128, min(max_tk, 8192))
    target = max(512, _round_up(pl.cdiv(hw, 4), 128))
    return min(max_tk, target)


def _vmem_limit_bytes(bc, tk, itemsize):
    cap = _vmem_capacity()
    need = 2 * _round_up(bc, 8) * _round_up(tk, 128) * itemsize   # feature tiles (x2 buf)
    need += 2 * _round_up(bc, 8) * _round_up(bc, 128) * 4         # resident partial Gram block
    need = int(need * 1.3) + (2 << 20)                            # compiler headroom
    return min(max(need, 16 << 20), int(cap * 0.7))


# ----------------------------- kernel ---------------------------------------


def _partial_gram_kernel(feat_ref, out_ref, *, hw, tk, kpc, needs_mask, cast_bf16):
    """Accumulate F_chunk @ F_chunk.T over this core's K range into out_ref.

    feat_ref: (BC, TK) feature tile in VMEM (k-th slice of this core's HW range)
    out_ref : (1, BC, BC) f32 partial Gram output block, resident across the K
              axis (the output block index only depends on the parallel axis),
              so it doubles as the accumulator — no separate scratch needed.
    """
    c = pl.program_id(0)
    k = pl.program_id(1)

    @pl.when(k == 0)
    def _init():
        out_ref[...] = jnp.zeros_like(out_ref)

    f = feat_ref[...]
    if needs_mask:
        # Zero out lanes past the true HW extent: covers the ragged last tile
        # (out-of-bounds block reads return unspecified data on TPU) and the
        # fully-out-of-range duplicate tile a clamped index_map can produce.
        start = (c * kpc + k) * tk
        col = start + lax.broadcasted_iota(jnp.int32, f.shape, 1)
        f = jnp.where(col < hw, f, jnp.zeros_like(f))
    if cast_bf16 and f.dtype == jnp.float32:
        # Optional speed/precision trade-off: native bf16 MXU passes instead of
        # the ~3x f32 emulation; accumulation stays f32.
        f = f.astype(jnp.bfloat16)
    # F @ F.T expressed as a transposed-RHS contraction (MXU, no XLU transpose).
    out_ref[0] += lax.dot_general(
        f, f,
        dimension_numbers=(((1,), (1,)), ((), ())),
        preferred_element_type=jnp.float32,
    )


# ----------------------------- wrappers -------------------------------------


def _partial_grams(x_nchw, cast_bf16):
    """Un-normalized partial Gram matrices, one per core-split of the HW axis."""
    b, c, h, w = x_nchw.shape
    bc, hw = b * c, h * w
    feat = x_nchw.reshape(bc, hw)           # same row-major view as torch .view
    tk = _choose_tk(bc, hw, feat.dtype.itemsize)
    total_k = pl.cdiv(hw, tk)
    ncores = 2 if total_k >= 2 else 1       # leading "parallel" axis for v7x's 2 TCs
    kpc = pl.cdiv(total_k, ncores)
    clamp = ncores * kpc > total_k          # odd block count: last tile duplicated
    needs_mask = ncores * kpc * tk != hw

    def feat_map(ci, ki):
        idx = ci * kpc + ki
        if clamp:
            idx = jnp.minimum(idx, total_k - 1)   # keep the DMA in bounds
        return (0, idx)

    kernel = functools.partial(
        _partial_gram_kernel, hw=hw, tk=tk, kpc=kpc,
        needs_mask=needs_mask, cast_bf16=cast_bf16)

    # TODO(synk): for bc >~ 1800 the (bc, bc) f32 partial-Gram block no longer
    # fits v7x VMEM; a row/col-tiled Gram grid would be needed at that scale.
    partials = pl.pallas_call(
        kernel,
        out_shape=jax.ShapeDtypeStruct((ncores, bc, bc), jnp.float32),
        grid_spec=pltpu.PrefetchScalarGridSpec(
            num_scalar_prefetch=0,
            grid=(ncores, kpc),
            in_specs=[pl.BlockSpec((bc, tk), feat_map)],
            out_specs=pl.BlockSpec((1, bc, bc), lambda ci, ki: (ci, 0, 0)),
        ),
        compiler_params=pltpu.CompilerParams(
            dimension_semantics=("parallel", "arbitrary"),
            vmem_limit_bytes=_vmem_limit_bytes(bc, tk, feat.dtype.itemsize),
        ),
    )(feat)
    return partials, bc, hw


@functools.partial(jax.jit, static_argnames=("cast_bf16",))
def gram_matrix(x_nchw, cast_bf16=False):
    """Pallas Gram matrix, same semantics as the PyTorch gram_matrix()."""
    partials, bc, hw = _partial_grams(x_nchw, cast_bf16)
    return jnp.sum(partials, axis=0) * (1.0 / float(bc * hw))


@functools.partial(jax.jit, static_argnames=("cast_bf16",))
def style_loss_value(x_nchw, target_gram, cast_bf16=False):
    """mse_loss(gram_matrix(x), target_gram); MSE fuses in the jitted wrapper."""
    partials, bc, hw = _partial_grams(x_nchw, cast_bf16)
    g = jnp.sum(partials, axis=0) * (1.0 / float(bc * hw))
    diff = g - target_gram.astype(jnp.float32)
    return jnp.mean(diff * diff)


class StyleLoss:
    """JAX/Pallas port of the PyTorch StyleLoss module.

    __init__ stores the (detached) Gram matrix of the target feature.
    __call__ computes self.loss = mse(gram(x), target) and returns x unchanged.
    """

    def __init__(self, target_feature, cast_bf16=False):
        self._cast_bf16 = cast_bf16
        self.target = lax.stop_gradient(
            gram_matrix(target_feature, cast_bf16=cast_bf16))
        self.loss = None

    def __call__(self, x):
        self.loss = style_loss_value(x, self.target, cast_bf16=self._cast_bf16)
        return x


# ----------------------------- self-test ------------------------------------


def _gram_ref(x):
    b, c, h, w = x.shape
    f = np.asarray(x, dtype=np.float64).reshape(b * c, h * w)
    return (f @ f.T) / (b * c * h * w)


if __name__ == "__main__":
    key = jax.random.PRNGKey(0)

    def check(b, c, h, w, tag):
        k_t, k_x = jax.random.split(jax.random.fold_in(key, tag))
        target_feature = jax.random.normal(k_t, (b, c, h, w), dtype=jnp.float32)
        x = jax.random.normal(k_x, (b, c, h, w), dtype=jnp.float32)

        module = StyleLoss(target_feature)
        out = module(x)
        out = jax.block_until_ready(out)
        loss = float(jax.block_until_ready(module.loss))

        g_ref = _gram_ref(x)
        t_ref = _gram_ref(target_feature)
        loss_ref = float(np.mean((g_ref - t_ref) ** 2))

        assert out.shape == x.shape and bool(jnp.all(out == x))
        np.testing.assert_allclose(np.asarray(module.target), t_ref,
                                   rtol=1e-4, atol=1e-5)
        np.testing.assert_allclose(loss, loss_ref, rtol=1e-3, atol=1e-8)

    # Small NCHW feature maps chosen to exercise every tiling path cheaply.
    check(2, 4, 16, 16, tag=0)    # hw=256: single K block, single core-split
    check(1, 8, 64, 64, tag=1)    # hw=4096: 4 K blocks, 2-way core split, no mask
    check(1, 8, 40, 40, tag=2)    # hw=1600: ragged last K block -> in-kernel mask
    check(1, 16, 36, 36, tag=3)   # hw=1296: odd block count -> clamped index_map + mask

    # Optional bf16-operand MXU path (precision trade-off): loose-tolerance sanity.
    xf = jax.random.normal(jax.random.fold_in(key, 99), (1, 8, 64, 64),
                           dtype=jnp.float32)
    g_bf16 = jax.block_until_ready(gram_matrix(xf, cast_bf16=True))
    np.testing.assert_allclose(np.asarray(g_bf16), _gram_ref(xf),
                               rtol=5e-2, atol=1e-3)

    print("KERNEL_OK")
</pallas_src>

<mosaic_0001>
module attributes {stable_mosaic.version = 11 : i64} {
  func.func @_partial_gram_kernel(%arg0: i32, %arg1: i32, %arg2: memref<8x256xf32, #tpu.memory_space<vmem>>, %arg3: memref<1x8x8xf32, #tpu.memory_space<vmem>>) attributes {dimension_semantics = [#tpu.dimension_semantics<parallel>, #tpu.dimension_semantics<arbitrary>], iteration_bounds = array<i64: 1, 1>, scalar_prefetch = 0 : i64, scratch_operands = 0 : i64, tpu.core_type = #tpu.core_type<tc>, window_params = [{transform_indices = @transform_0, window_bounds = array<i64: 8, 256>}, {transform_indices = @transform_1, window_bounds = array<i64: 1, 8, 8>}]} {
    %c0_i32 = arith.constant 0 : i32
    %0 = arith.cmpi eq, %arg1, %c0_i32 : i32
    %1 = arith.extui %0 : i1 to i32
    %c0_i32_0 = arith.constant 0 : i32
    %2 = arith.cmpi ne, %1, %c0_i32_0 : i32
    scf.if %2 {
      %cst_8 = arith.constant 0.000000e+00 : f32
      %11 = vector.broadcast %cst_8 : f32 to vector<1x8x8xf32>
      %c0_9 = arith.constant 0 : index
      %c0_10 = arith.constant 0 : index
      %c0_11 = arith.constant 0 : index
      %12 = vector.load %arg3[%c0_9, %c0_10, %c0_11] : memref<1x8x8xf32, #tpu.memory_space<vmem>>, vector<1x8x8xf32>
      tpu.vector_store %arg3[%c0_9, %c0_10, %c0_11], %11 {strides = array<i32>} : memref<1x8x8xf32, #tpu.memory_space<vmem>>, vector<1x8x8xf32>,
    } else {
    }
    %c0 = arith.constant 0 : index
    %c0_1 = arith.constant 0 : index
    %3 = vector.load %arg2[%c0, %c0_1] : memref<8x256xf32, #tpu.memory_space<vmem>>, vector<8x256xf32>
    %c0_2 = arith.constant 0 : index
    %c0_3 = arith.constant 0 : index
    %c0_4 = arith.constant 0 : index
    %4 = vector.load %arg3[%c0_2, %c0_3, %c0_4] : memref<1x8x8xf32, #tpu.memory_space<vmem>>, vector<1x8x8xf32>
    %5 = vector.shape_cast %4 : vector<1x8x8xf32> to vector<8x8xf32>
    %cst = arith.constant dense<0.000000e+00> : vector<8x8xf32>
    %6 = tpu.matmul %3, %3, %cst {dimension_numbers = #tpu.dot_dimension_numbers<[1], [1], [0], [0], [0, 0, 1, 0], [], []>} : vector<8x256xf32>, vector<8x256xf32>, vector<8x8xf32> -> vector<8x8xf32>
    %7 = arith.addf %5, %6 : vector<8x8xf32>
    %c0_5 = arith.constant 0 : index
    %c0_6 = arith.constant 0 : index
    %c0_7 = arith.constant 0 : index
    %8 = vector.load %arg3[%c0_5, %c0_6, %c0_7] : memref<1x8x8xf32, #tpu.memory_space<vmem>>, vector<1x8x8xf32>
    %9 = vector.shape_cast %8 : vector<1x8x8xf32> to vector<8x8xf32>
    %10 = vector.shape_cast %7 : vector<8x8xf32> to vector<1x8x8xf32>
    tpu.vector_store %arg3[%c0_5, %c0_6, %c0_7], %10 {strides = array<i32>} : memref<1x8x8xf32, #tpu.memory_space<vmem>>, vector<1x8x8xf32>,
    return
  }
  func.func @transform_0(%arg0: i32, %arg1: i32) -> (i32, i32) {
    %c1_i32 = arith.constant 1 : i32
    %0 = arith.muli %arg0, %c1_i32 : i32
    %1 = arith.addi %0, %arg1 : i32
    %c0_i32 = arith.constant 0 : i32
    %c0_i32_0 = arith.constant 0 : i32
    return %c0_i32, %1 : i32, i32
  }
  func.func @transform_1(%arg0: i32, %arg1: i32) -> (i32, i32, i32) {
    %c0_i32 = arith.constant 0 : i32
    %c0_i32_0 = arith.constant 0 : i32
    %c0_i32_1 = arith.constant 0 : i32
    return %arg0, %c0_i32, %c0_i32_0 : i32, i32, i32
  }
}

</mosaic_0001>

<llo_original>
// kernel: gram_matrix.1
$region0: #{gram_matrix.1}
  #allocation0 [shape = 'u32[]', space=smem, size = 0x4, offset = 0x4, fixed_abs, tag = 'smem constant byte address 0x4 - core index']
  #allocation1 [shape = 'u32[144,128]{1,0:T(1,128)}', space=vmem, size = 0x12000, scoped, tag = 'internal scratch']
  %s0 = inlined_call_operand.vmem [shape: f32[8,256], index: 0, kind: input, shape index: {}]
  %s1 = inlined_call_operand.vmem [shape: f32[1,8,8], index: 1, kind: output, shape index: {}]
  %s2 = sld [smem:[#allocation0]]
  $region18: #{gram_matrix.1} parent=0
    _
  %s4 = ssub.s32 1, %s2
  %s5 = scalar_select 0, %s4, %s2
  // Predicated region
  $region2: #{gram_matrix.1} parent=0 // pred_check
    _
  $region3: #{gram_matrix.1} parent=0 // pred_check_branch
    %7 = sbr.rel (0) target = $region5
  $region4: #{gram_matrix.1} parent=0 // pred_region
    %s8 = sadd.s32 0, 0
    %s9 = smul.u32 2, %s8
    %p10 = scmp.lt.s32.totalorder %s9, 1
    %s11 = scalar_select %p10, %s9, 1
    %s12 = smul.addr %s11, 8
    %s13 = scalar_lea.vmem %s0, %s12
    %s14 = sadd.s32 0, 0
    %s15 = smul.u32 2, %s14
  $region5: #{gram_matrix.1} parent=0 // pred_fallthru
    _
  %s16 = sadd.s32 0, 0
  %s17 = smul.u32 2, %s16
  %p18 = scmp.lt.s32.totalorder %s17, 1
  %s19 = scalar_select %p18, %s17, 1
  %s20 = smul.addr %s19, 8
  %s21 = scalar_lea.vmem %s0, %s20
  %s22 = sadd.s32 0, 0
  %s23 = smul.u32 2, %s22
  %p24 = scmp.lt.s32.totalorder %s23, 1
  %s25 = scalar_select %p24, %s23, 1
  %s26 = smul.addr %s25, 8
  %s27 = scalar_lea.vmem %s0, %s26
  %s28 = sadd.s32 0, 0
  %s29 = smul.u32 2, %s28
  %p30 = scmp.eq.s32.totalorder 0, 0
  // Predicated region
  $region6: #{gram_matrix.1} parent=0 // pred_check
    %p31 = pneg %p30
  $region7: #{gram_matrix.1} parent=0 // pred_check_branch
    %33 = sbr.rel (%p31) target = $region9
  $region8: #{gram_matrix.1} parent=0 // pred_region
    %vm34 = vcmask 64512
    %35 = vst.msk [vmem:[%s1] sm:$0xff] %vm34, 0.0
  $region9: #{gram_matrix.1} parent=0 // pred_fallthru
    _
  %v36 = vld [vmem:[%s27] sm:$0xff]
  %v37 = vld [vmem:[%s27 + $0x8] sm:$0xff]
  %v38 = vld [vmem:[%s1] sm:$0xff]
  %39 = vmatprep.subr.mxu0 0.0
  %40 = vmatpush1.xpose.msra.mxu0 0.0
  %41 = vmatprep.subr.mxu0 0.0
  %42 = vmatpush1.xpose.msra.mxu0 0.0
  %43 = vmatprep.subr.mxu0 0.0
  %44 = vmatpush1.xpose.msra.mxu0 0.0
  %45 = vmatprep.subr.mxu0 0.0
  %46 = vmatpush1.xpose.msra.mxu0 0.0
  %47 = vmatprep.subr.mxu0 0.0
  %48 = vmatpush1.xpose.msra.mxu0 0.0
  %49 = vmatprep.subr.mxu0 0.0
  %50 = vmatpush1.xpose.msra.mxu0 0.0
  %51 = vmatprep.subr.mxu0 0.0
  %52 = vmatpush1.xpose.msra.mxu0 0.0
  %53 = vmatprep.subr.mxu0 0.0
  %54 = vmatpush1.xpose.msra.mxu0 0.0
  %55 = vmatprep.subr.mxu0 0.0
  %56 = vmatpush1.xpose.msra.mxu0 0.0
  %57 = vmatprep.subr.mxu0 0.0
  %58 = vmatpush1.xpose.msra.mxu0 0.0
  %59 = vmatprep.subr.mxu0 0.0
  %60 = vmatpush1.xpose.msra.mxu0 0.0
  %61 = vmatprep.subr.mxu0 0.0
  %62 = vmatpush1.xpose.msra.mxu0 0.0
  %63 = vmatprep.subr.mxu0 0.0
  %64 = vmatpush1.xpose.msra.mxu0 0.0
  %65 = vmatprep.subr.mxu0 0.0
  %66 = vmatpush1.xpose.msra.mxu0 0.0
  %67 = vmatprep.subr.mxu0 0.0
  %68 = vmatpush1.xpose.msra.mxu0 0.0
  %69 = vmatprep.subr.mxu0 %v37
  %70 = vmatpush1.xpose.msra.mxu0 %v36
  %71 = vmatprep.subr.mxu0 0.0
  %72 = vmatpush2.xpose.msra.mxu0 0.0
  %73 = vmatprep.subr.mxu0 0.0
  %74 = vmatpush2.xpose.msra.mxu0 0.0
  %75 = vmatprep.subr.mxu0 0.0
  %76 = vmatpush2.xpose.msra.mxu0 0.0
  %77 = vmatprep.subr.mxu0 0.0
  %78 = vmatpush2.xpose.msra.mxu0 0.0
  %79 = vmatprep.subr.mxu0 0.0
  %80 = vmatpush2.xpose.msra.mxu0 0.0
  %81 = vmatprep.subr.mxu0 0.0
  %82 = vmatpush2.xpose.msra.mxu0 0.0
  %83 = vmatprep.subr.mxu0 0.0
  %84 = vmatpush2.xpose.msra.mxu0 0.0
  %85 = vmatprep.subr.mxu0 0.0
  %86 = vmatpush2.xpose.msra.mxu0 0.0
  %87 = vmatprep.subr.mxu0 0.0
  %88 = vmatpush2.xpose.msra.mxu0 0.0
  %89 = vmatprep.subr.mxu0 0.0
  %90 = vmatpush2.xpose.msra.mxu0 0.0
  %91 = vmatprep.subr.mxu0 0.0
  %92 = vmatpush2.xpose.msra.mxu0 0.0
  %93 = vmatprep.subr.mxu0 0.0
  %94 = vmatpush2.xpose.msra.mxu0 0.0
  %95 = vmatprep.subr.mxu0 0.0
  %96 = vmatpush2.xpose.msra.mxu0 0.0
  %97 = vmatprep.subr.mxu0 0.0
  %98 = vmatpush2.xpose.msra.mxu0 0.0
  %99 = vmatprep.subr.mxu0 0.0
  %100 = vmatpush2.xpose.msra.mxu0 0.0
  %101 = vmatprep.subr.mxu0 0.0
  %102 = vmatpush2.xpose.msra.mxu0 0.0
  %103 = vmatprep.mubr.f32.mxu0 %v37
  %104 = vmatmul.mubr.f32.gmra.mxu0 %v36
  %v105 = vpop.f32.mrf.mxu0
  %v106 = vadd.f32 0.0, %v105
  %v107 = vpop.f32.mrf.mxu0
  %108 = vdwg.mxu0
  %v109 = vadd.f32 %v38, %v106
  %vm110 = vcmask 64512
  %111 = vst.msk [vmem:[%s1] sm:$0xff] %vm110, %v109
  // Predicated region
  $region10: #{gram_matrix.1} parent=0 // pred_check
    _
  $region11: #{gram_matrix.1} parent=0 // pred_check_branch
    %113 = sbr.rel (0) target = $region13
  $region12: #{gram_matrix.1} parent=0 // pred_region
    _
  $region13: #{gram_matrix.1} parent=0 // pred_fallthru
    _
  // Predicated region
  $region14: #{gram_matrix.1} parent=0 // pred_check
    _
  $region15: #{gram_matrix.1} parent=0 // pred_check_branch
    %115 = sbr.rel (0) target = $region17
  $region16: #{gram_matrix.1} parent=0 // pred_region
    _
  $region17: #{gram_matrix.1} parent=0 // pred_fallthru
    _

</llo_original>
